<compile_context>
chip_gen: v7x
topology: tpu7x:2x2x1
jax: 0.10.0
libtpu: 0.0.40
codegen_flags: <defaults>
</compile_context>

<pallas_src>
import jax
import jax.numpy as jnp
from jax.experimental import pallas as pl
from jax.experimental.pallas import tpu as pltpu


# ----------------------------------------------------------------------------
# Fused kernel: in-kernel gather via one-hot MXU matmul against a resident
# (H, 2*n_pad) projection table (b1 already folded in).
#   h   = relu( table @ onehot(src, dst) )          (H, tile_e), f32 accumulation
#   out = sum_H( h * w2 )                           (1, tile_e), lane-dense
# ----------------------------------------------------------------------------
def _fused_edge_mlp_kernel(idx_ref, table_ref, w2_ref, out_ref):
    n2 = table_ref.shape[1]            # 2 * n_pad (static)
    n_pad = n2 // 2
    tile_e = idx_ref.shape[1]

    src = idx_ref[0:1, :]              # (1, tile_e) int32
    dst = idx_ref[1:2, :]
    row = jax.lax.broadcasted_iota(jnp.int32, (n2, tile_e), 0)
    # One-hot "gather + concat" matrix: row src picks Pa[:, src] (bias folded in),
    # row n_pad + dst picks Pb[:, dst]; the MXU sums the two columns for us.
    hit = jnp.logical_or(row == src, row == dst + n_pad)
    onehot = jnp.where(hit, 1.0, 0.0).astype(jnp.bfloat16)    # (2*n_pad, tile_e)

    h = jnp.dot(table_ref[...], onehot, preferred_element_type=jnp.float32)
    h = jnp.maximum(h, 0.0)                                   # bias already folded
    out = jnp.sum(h * w2_ref[...], axis=0, keepdims=True)     # VPU mul + XLU reduce
    out_ref[...] = out.astype(out_ref.dtype)


# ----------------------------------------------------------------------------
# Fallback kernel for large N (one-hot gather not profitable): consumes a
# pre-gathered (2D, tile_e) bf16 slab.  b1 / w2 arrive as one merged (H, 2) operand.
# ----------------------------------------------------------------------------
def _slab_edge_mlp_kernel(slab_ref, w1t_ref, b1w2_ref, out_ref):
    h = jnp.dot(w1t_ref[...], slab_ref[...], preferred_element_type=jnp.float32)
    h = jnp.maximum(h + b1w2_ref[:, 0:1], 0.0)
    out = jnp.sum(h * b1w2_ref[:, 1:2], axis=0, keepdims=True)
    out_ref[...] = out.astype(out_ref.dtype)


_COMPILER_PARAMS = pltpu.CompilerParams(
    dimension_semantics=("parallel",),          # edge tiles are independent
    vmem_limit_bytes=32 * 1024 * 1024,          # explicit budget; fits v7x's 64 MiB phys
)


def _tile_and_pad(E, tile_e, onehot_rows=None, onehot_budget=2 * 1024 * 1024):
    """128-align tile_e, keep >=2 grid steps (v7x megacore), cap one-hot VMEM usage."""
    e_ceil = pl.cdiv(E, 128) * 128
    tile_e = min(tile_e, e_ceil)
    if e_ceil >= 256:                           # >=2 grid steps -> both v7x TensorCores
        tile_e = min(tile_e, (e_ceil // 2) // 128 * 128)
    if onehot_rows is not None:                 # (onehot_rows, tile_e) bf16 intermediate
        cap = onehot_budget // (onehot_rows * 2)
        tile_e = min(tile_e, max(128, (cap // 128) * 128))
    tile_e = max(128, (tile_e // 128) * 128)
    e_pad = pl.cdiv(E, tile_e) * tile_e
    return tile_e, e_pad


def edge_mlp_pallas(node_emb, src, dst, w1, b1, w2, b2, *,
                    tile_e=8192, fuse_gather=None, fuse_max_nodes=1024):
    """logits[e] = W2 @ relu(W1 @ [emb[src[e]]; emb[dst[e]]] + b1) + b2  ->  (E, 1) f32.

    node_emb: (N, D) f32. src/dst: (E,) int. w1: (2D, H), b1: (H,), w2: (H, 1), b2: (1,).
    """
    N, D = node_emb.shape
    H = w1.shape[1]
    E = src.shape[0]
    assert w1.shape == (2 * D, H)

    src = src.astype(jnp.int32)
    dst = dst.astype(jnp.int32)
    if fuse_gather is None:
        fuse_gather = N <= fuse_max_nodes

    if fuse_gather:
        # ---- fused path: resident projection table + in-kernel one-hot MXU gather ----
        n_pad = pl.cdiv(N, 8) * 8
        pa = node_emb @ w1[:D] + b1[None, :]            # (N, H) f32, bias folded once
        pb = node_emb @ w1[D:]                          # (N, H) f32
        if n_pad != N:
            zpad = jnp.zeros((n_pad - N, H), jnp.float32)
            pa = jnp.concatenate([pa, zpad], axis=0)
            pb = jnp.concatenate([pb, zpad], axis=0)
        table = jnp.concatenate([pa.T, pb.T], axis=1).astype(jnp.bfloat16)  # (H, 2*n_pad)
        w2_col = w2.reshape(H, 1).astype(jnp.float32)

        tile_e, e_pad = _tile_and_pad(E, tile_e, onehot_rows=2 * n_pad)
        if e_pad != E:
            zpad = jnp.zeros((e_pad - E,), jnp.int32)
            src = jnp.concatenate([src, zpad])
            dst = jnp.concatenate([dst, zpad])
        idx = jnp.stack([src, dst])                     # (2, e_pad) int32: 8 B/edge HBM

        out = pl.pallas_call(
            _fused_edge_mlp_kernel,
            out_shape=jax.ShapeDtypeStruct((1, e_pad), jnp.float32),
            grid_spec=pltpu.PrefetchScalarGridSpec(
                num_scalar_prefetch=0,
                grid=(e_pad // tile_e,),
                in_specs=[
                    # TODO(synk): add pipeline_mode=pl.Buffered(3) here if xprof still
                    # shows exposed DMA at tile boundaries after enlarging tile_e.
                    pl.BlockSpec((2, tile_e), lambda i: (0, i)),        # index block
                    pl.BlockSpec((H, 2 * n_pad), lambda i: (0, 0)),     # resident table
                    pl.BlockSpec((H, 1), lambda i: (0, 0)),             # w2 column
                ],
                out_specs=pl.BlockSpec((1, tile_e), lambda i: (0, i)),  # lane-dense row
            ),
            compiler_params=_COMPILER_PARAMS,
        )(idx, table, w2_col)
    else:
        # ---- large-N fallback: wrapper row-gather (DMA-friendly), slab kernel ----
        # TODO(synk): replace with an in-kernel dynamic row gather / DMA gather once
        # Mosaic gather support covers it; the slab still costs one HBM round trip.
        tile_e, e_pad = _tile_and_pad(E, tile_e)
        if e_pad != E:
            zpad = jnp.zeros((e_pad - E,), jnp.int32)
            src = jnp.concatenate([src, zpad])
            dst = jnp.concatenate([dst, zpad])
        slab = jnp.concatenate([node_emb[src], node_emb[dst]], axis=1)   # row gathers
        slab = slab.astype(jnp.bfloat16).T                               # (2D, e_pad)
        w1_t = w1.T.astype(jnp.bfloat16)                                 # (H, 2D)
        b1w2 = jnp.stack([b1, w2[:, 0]], axis=1).astype(jnp.float32)     # (H, 2) merged

        out = pl.pallas_call(
            _slab_edge_mlp_kernel,
            out_shape=jax.ShapeDtypeStruct((1, e_pad), jnp.float32),
            grid_spec=pltpu.PrefetchScalarGridSpec(
                num_scalar_prefetch=0,
                grid=(e_pad // tile_e,),
                in_specs=[
                    pl.BlockSpec((2 * D, tile_e), lambda i: (0, i)),     # slab tile
                    pl.BlockSpec((H, 2 * D), lambda i: (0, 0)),          # W1^T resident
                    pl.BlockSpec((H, 2), lambda i: (0, 0)),              # [b1 | w2]
                ],
                out_specs=pl.BlockSpec((1, tile_e), lambda i: (0, i)),
            ),
            compiler_params=_COMPILER_PARAMS,
        )(slab, w1_t, b1w2)

    # Final scalar bias added here (avoids a 1x1 VMEM tile); slice off lane padding.
    return out[0, :E].reshape(E, 1) + b2.reshape(1, 1)


# ----------------------------------------------------------------------------
# Parameter init (matches ViewLearner.init_emb: xavier_uniform weights, 0 bias)
# ----------------------------------------------------------------------------
def xavier_uniform(key, shape):
    fan_in, fan_out = shape
    bound = (6.0 / (fan_in + fan_out)) ** 0.5
    return jax.random.uniform(key, shape, jnp.float32, -bound, bound)


class ViewLearnerPallas:
    """JAX/Pallas equivalent of ViewLearner.forward."""

    def __init__(self, key, node_feat_dim, out_node_dim=32, mlp_edge_model_dim=64):
        k_enc, k_w1, k_w2 = jax.random.split(key, 3)
        self.input_dim = out_node_dim
        # TODO(synk): the real GNN encoder is an injected external module; stand in
        # with a deterministic linear node encoder (plain-JAX glue, not the hot path).
        self.enc_w = xavier_uniform(k_enc, (node_feat_dim, out_node_dim))
        # mlp_edge_model = Linear(2D, H) -> ReLU -> Linear(H, 1), zero biases.
        self.w1 = xavier_uniform(k_w1, (2 * out_node_dim, mlp_edge_model_dim))
        self.b1 = jnp.zeros((mlp_edge_model_dim,), jnp.float32)
        self.w2 = xavier_uniform(k_w2, (mlp_edge_model_dim, 1))
        self.b2 = jnp.zeros((1,), jnp.float32)

    def __call__(self, batch, x, edge_index, edge_attr, training=False):
        node_emb = x @ self.enc_w                       # stand-in encoder (glue)
        src, dst = edge_index[0], edge_index[1]
        return edge_mlp_pallas(node_emb, src, dst,
                               self.w1, self.b1, self.w2, self.b2)   # (E, 1)


def reference_edge_mlp(node_emb, src, dst, w1, b1, w2, b2):
    edge_emb = jnp.concatenate([node_emb[src], node_emb[dst]], axis=1)
    h = jnp.maximum(edge_emb @ w1 + b1, 0.0)
    return h @ w2 + b2


if __name__ == "__main__":
    key = jax.random.PRNGKey(0)
    k_param, k_data = jax.random.split(key)

    F, D, H = 8, 32, 64
    model = ViewLearnerPallas(k_param, node_feat_dim=F,
                              out_node_dim=D, mlp_edge_model_dim=H)

    def check(out, node_emb, src, dst):
        ref = reference_edge_mlp(node_emb, src, dst,
                                 model.w1, model.b1, model.w2, model.b2)
        assert out.shape == ref.shape, (out.shape, ref.shape)
        err = float(jnp.max(jnp.abs(out - ref)))
        # bf16 MXU operands with f32 accumulation: ~1e-2-level differences vs f32 ref.
        assert jnp.allclose(out, ref, atol=5e-2, rtol=5e-2), err

    k1, k2, k3, k4, k5, k6 = jax.random.split(k_data, 6)

    # Case 1: small graph through the full module (fused gather path, single tile).
    N1, E1 = 16, 64
    x1 = jax.random.normal(k1, (N1, F), jnp.float32)
    ei1 = jnp.stack([jax.random.randint(k2, (E1,), 0, N1, jnp.int32),
                     jax.random.randint(k3, (E1,), 0, N1, jnp.int32)])
    ea1 = jax.random.normal(k4, (E1, 4), jnp.float32)      # unused by stand-in encoder
    batch1 = jnp.zeros((N1,), jnp.int32)
    out1 = jax.block_until_ready(model(batch1, x1, ei1, ea1, training=False))
    check(out1, x1 @ model.enc_w, ei1[0], ei1[1])

    # Case 2: E not a multiple of 128 and E > tile size -> multi-tile fused path,
    # exercising the tile clamps and the padding slice (review correctness concern).
    N2, E2 = 50, 300
    x2 = jax.random.normal(k5, (N2, F), jnp.float32)
    src2 = jax.random.randint(k6, (E2,), 0, N2, jnp.int32)
    dst2 = jax.random.randint(k2, (E2,), 0, N2, jnp.int32)
    ne2 = x2 @ model.enc_w
    out2 = jax.block_until_ready(
        edge_mlp_pallas(ne2, src2, dst2, model.w1, model.b1, model.w2, model.b2))
    check(out2, ne2, src2, dst2)

    # Case 3: same graph through the large-N fallback (slab kernel), multi-tile.
    out3 = jax.block_until_ready(
        edge_mlp_pallas(ne2, src2, dst2, model.w1, model.b1, model.w2, model.b2,
                        fuse_gather=False))
    check(out3, ne2, src2, dst2)

    print("KERNEL_OK")
</pallas_src>

<mosaic_0001>
module attributes {stable_mosaic.version = 11 : i64} {
  func.func @_fused_edge_mlp_kernel(%arg0: i32, %arg1: memref<2x128xi32, #tpu.memory_space<vmem>>, %arg2: memref<64x32xbf16, #tpu.memory_space<vmem>>, %arg3: memref<64x1xf32, #tpu.memory_space<vmem>>, %arg4: memref<1x128xf32, #tpu.memory_space<vmem>>) attributes {dimension_semantics = [#tpu.dimension_semantics<parallel>], iteration_bounds = array<i64: 1>, scalar_prefetch = 0 : i64, scratch_operands = 0 : i64, tpu.core_type = #tpu.core_type<tc>, window_params = [{transform_indices = @transform_0, window_bounds = array<i64: 2, 128>}, {pipeline_mode = #tpu.pipeline_mode<synchronous>, transform_indices = @transform_1, window_bounds = array<i64: 64, 32>}, {pipeline_mode = #tpu.pipeline_mode<synchronous>, transform_indices = @transform_2, window_bounds = array<i64: 64, 1>}, {transform_indices = @transform_3, window_bounds = array<i64: 1, 128>}]} {
    %c0 = arith.constant 0 : index
    %c0_0 = arith.constant 0 : index
    %0 = vector.load %arg1[%c0, %c0_0] : memref<2x128xi32, #tpu.memory_space<vmem>>, vector<1x128xi32>
    %c1 = arith.constant 1 : index
    %c0_1 = arith.constant 0 : index
    %1 = vector.load %arg1[%c1, %c0_1] : memref<2x128xi32, #tpu.memory_space<vmem>>, vector<1x128xi32>
    %2 = tpu.iota {dimensions = array<i32: 0>} : vector<32x128xi32>
    %3 = vector.broadcast %0 : vector<1x128xi32> to vector<32x128xi32>
    %4 = arith.cmpi eq, %2, %3 : vector<32x128xi32>
    %c16_i32 = arith.constant 16 : i32
    %5 = vector.broadcast %c16_i32 : i32 to vector<1x128xi32>
    %6 = arith.addi %1, %5 : vector<1x128xi32>
    %7 = vector.broadcast %6 : vector<1x128xi32> to vector<32x128xi32>
    %8 = arith.cmpi eq, %2, %7 : vector<32x128xi32>
    %9 = arith.ori %4, %8 : vector<32x128xi1>
    %cst = arith.constant 1.000000e+00 : f32
    %cst_2 = arith.constant 0.000000e+00 : f32
    %10 = vector.broadcast %cst : f32 to vector<32x128xf32>
    %11 = vector.broadcast %cst_2 : f32 to vector<32x128xf32>
    %12 = arith.select %9, %10, %11 : vector<32x128xi1>, vector<32x128xf32>
    %13 = arith.truncf %12 : vector<32x128xf32> to vector<32x128xbf16>
    %c0_3 = arith.constant 0 : index
    %c0_4 = arith.constant 0 : index
    %14 = vector.load %arg2[%c0_3, %c0_4] : memref<64x32xbf16, #tpu.memory_space<vmem>>, vector<64x32xbf16>
    %cst_5 = arith.constant dense<0.000000e+00> : vector<64x128xf32>
    %15 = tpu.matmul %14, %13, %cst_5 {dimension_numbers = #tpu.dot_dimension_numbers<[1], [0], [0], [1], [0, 0, 1, 1], [], []>} : vector<64x32xbf16>, vector<32x128xbf16>, vector<64x128xf32> -> vector<64x128xf32>
    %cst_6 = arith.constant 0.000000e+00 : f32
    %16 = vector.broadcast %cst_6 : f32 to vector<64x128xf32>
    %17 = arith.maximumf %15, %16 : vector<64x128xf32>
    %c0_7 = arith.constant 0 : index
    %c0_8 = arith.constant 0 : index
    %18 = vector.load %arg3[%c0_7, %c0_8] : memref<64x1xf32, #tpu.memory_space<vmem>>, vector<64x1xf32>
    %19 = vector.broadcast %18 : vector<64x1xf32> to vector<64x128xf32>
    %20 = arith.mulf %17, %19 : vector<64x128xf32>
    %cst_9 = arith.constant dense<0.000000e+00> : vector<128xf32>
    %21 = vector.multi_reduction <add>, %20, %cst_9 [0] : vector<64x128xf32> to vector<128xf32>
    %22 = vector.shape_cast %21 : vector<128xf32> to vector<1x128xf32>
    %c0_10 = arith.constant 0 : index
    %c0_11 = arith.constant 0 : index
    %23 = vector.load %arg4[%c0_10, %c0_11] : memref<1x128xf32, #tpu.memory_space<vmem>>, vector<1x128xf32>
    tpu.vector_store %arg4[%c0_10, %c0_11], %22 {strides = array<i32>} : memref<1x128xf32, #tpu.memory_space<vmem>>, vector<1x128xf32>,
    return
  }
  func.func @transform_0(%arg0: i32) -> (i32, i32) {
    %c0_i32 = arith.constant 0 : i32
    %c0_i32_0 = arith.constant 0 : i32
    return %c0_i32, %arg0 : i32, i32
  }
  func.func @transform_1(%arg0: i32) -> (i32, i32) {
    %c0_i32 = arith.constant 0 : i32
    %c0_i32_0 = arith.constant 0 : i32
    %c0_i32_1 = arith.constant 0 : i32
    return %c0_i32, %c0_i32_0 : i32, i32
  }
  func.func @transform_2(%arg0: i32) -> (i32, i32) {
    %c0_i32 = arith.constant 0 : i32
    %c0_i32_0 = arith.constant 0 : i32
    %c0_i32_1 = arith.constant 0 : i32
    return %c0_i32, %c0_i32_0 : i32, i32
  }
  func.func @transform_3(%arg0: i32) -> (i32, i32) {
    %c0_i32 = arith.constant 0 : i32
    %c0_i32_0 = arith.constant 0 : i32
    return %c0_i32, %arg0 : i32, i32
  }
}

</mosaic_0001>

<llo_original>
// kernel: tpu_custom_call.1
$region0: #{tpu_custom_call.1}
  #allocation0 [shape = 'u32[]', space=smem, size = 0x4, offset = 0x4, fixed_abs, tag = 'smem constant byte address 0x4 - core index']
  #allocation1 [shape = 'u32[144,128]{1,0:T(1,128)}', space=vmem, size = 0x12000, scoped, tag = 'internal scratch']
  %s0 = inlined_call_operand.vmem [shape: s32[2,128], index: 0, kind: input, shape index: {}]
  %s1 = inlined_call_operand.vmem [shape: bf16[64,32], index: 1, kind: input, shape index: {}]
  %s2 = inlined_call_operand.vmem [shape: f32[64,1], index: 2, kind: input, shape index: {}]
  %s3 = inlined_call_operand.hbm [shape: f32[1,128], index: 3, kind: output, shape index: {}]
  %s4 = sld [smem:[#allocation0]]
  $region22: #{tpu_custom_call.1} parent=0
    _
  %s6 = ssub.s32 1, %s4
  %s7 = scalar_select 0, %s6, %s4
  $region1: #{tpu_custom_call.1} parent=0
    #allocation2 [shape = 'u8[512]{0}', space=vmem, size = 0x400, scoped, tag = 'output window, operand 0, single buffered']
    #allocation3 [shape = 's32[1]{0}', space=sflag, size = 0x4, scoped, tag = 'scoped memory for tpu_custom_call.1']
    %8 = vsyncpa [#allocation3], 0
    // Predicated region
    $region2: #{tpu_custom_call.1} parent=1 // pred_check
      _
    $region3: #{tpu_custom_call.1} parent=1 // pred_check_branch
      %10 = sbr.rel (0) target = $region5
    $region4: #{tpu_custom_call.1} parent=1 // pred_region
      _
    $region5: #{tpu_custom_call.1} parent=1 // pred_fallthru
      _
    // Predicated region
    $region6: #{tpu_custom_call.1} parent=1 // pred_check
      _
    $region7: #{tpu_custom_call.1} parent=1 // pred_check_branch
      %12 = sbr.rel (0) target = $region9
    $region8: #{tpu_custom_call.1} parent=1 // pred_region
      _
    $region9: #{tpu_custom_call.1} parent=1 // pred_fallthru
      _
    // Predicated region
    $region10: #{tpu_custom_call.1} parent=1 // pred_check
      _
    $region11: #{tpu_custom_call.1} parent=1 // pred_check_branch
      %14 = sbr.rel (0) target = $region13
    $region12: #{tpu_custom_call.1} parent=1 // pred_region
      _
    $region13: #{tpu_custom_call.1} parent=1 // pred_fallthru
      _
    %v16 = vld [vmem:[%s0] sm:$0x1]
    %v17 = vld [vmem:[%s0 + $0x1] sm:$0x1]
    %v18 = vlaneseq
    %v19 = vshrl.u32 %v18, 7
    %v20 = vadd.s32 %v19, 8
    %v21 = vadd.s32 %v19, 16
    %v22 = vadd.s32 %v19, 24
    %v23 = vlaneseq
    %v24 = vshrl.u32 %v23, 7
    %v25 = vsub.s32 0, %v24
    %v26 = vrot.slane %v16, %v25
    %vm27 = vcmp.eq.s32.totalorder %v19, %v26
    %vm28 = vcmp.eq.s32.totalorder %v20, %v26
    %vm29 = vcmp.eq.s32.totalorder %v21, %v26
    %vm30 = vcmp.eq.s32.totalorder %v22, %v26
    %v31 = vadd.s32 %v17, 16
    %v32 = vlaneseq
    %v33 = vshrl.u32 %v32, 7
    %v34 = vsub.s32 0, %v33
    %v35 = vrot.slane %v31, %v34
    %vm36 = vcmp.eq.s32.totalorder %v19, %v35
    %vm37 = vcmp.eq.s32.totalorder %v20, %v35
    %vm38 = vcmp.eq.s32.totalorder %v21, %v35
    %vm39 = vcmp.eq.s32.totalorder %v22, %v35
    %vm40 = vmor %vm27, %vm36
    %vm41 = vmor %vm28, %vm37
    %vm42 = vmor %vm29, %vm38
    %vm43 = vmor %vm30, %vm39
    %v44 = vsel %vm40, 1.0, 0.0
    %v45 = vsel %vm41, 1.0, 0.0
    %v46 = vsel %vm42, 1.0, 0.0
    %v47 = vsel %vm43, 1.0, 0.0
    %v48 = vpack.c.bf16 %v45, %v44
    %v49 = vpack.c.bf16 %v47, %v46
    %v50 = vld [vmem:[%s1] sm:$0xf]
    %v51 = vld [vmem:[%s1 + $0x4] sm:$0xf]
    %v52 = vld [vmem:[%s1 + $0x8] sm:$0xf]
    %v53 = vld [vmem:[%s1 + $0xc] sm:$0xf]
    %v54 = vld [vmem:[%s1 + $0x10] sm:$0xf]
    %v55 = vld [vmem:[%s1 + $0x14] sm:$0xf]
    %v56 = vld [vmem:[%s1 + $0x18] sm:$0xf]
    %v57 = vld [vmem:[%s1 + $0x1c] sm:$0xf]
    %v66 = vunpack.c.l.b16 %v50
    %v67 = vunpack.c.l.b16 %v51
    %v68 = vunpack.c.l.b16 %v52
    %v69 = vunpack.c.l.b16 %v53
    %v70 = vunpack.c.l.b16 %v54
    %v71 = vunpack.c.l.b16 %v55
    %v72 = vunpack.c.l.b16 %v56
    %v73 = vunpack.c.l.b16 %v57
    %v74 = vpack.c.b16 %v67, %v66
    %v75 = vpack.c.b16 %v69, %v68
    %v76 = vpack.c.b16 %v71, %v70
    %v77 = vpack.c.b16 %v73, %v72
    %vm78 = vcmask 261120
    %v80 = vsel %vm78, %v74, 0
    %v83 = vsel %vm78, %v75, 0
    %v86 = vsel %vm78, %v76, 0
    %v89 = vsel %vm78, %v77, 0
    %91 = vmatprep.subr.bf16.mxu0 0
    %92 = vmatpush1.bf16.msra.mxu0 %v48
    %93 = vmatprep.subr.bf16.mxu0 0
    %94 = vmatpush1.bf16.msra.mxu0 %v49
    %95 = vmatprep.subr.bf16.mxu0 0
    %96 = vmatpush1.bf16.msra.mxu0 0
    %97 = vmatprep.subr.bf16.mxu0 0
    %98 = vmatpush1.bf16.msra.mxu0 0
    %99 = vmatprep.subr.bf16.mxu0 0
    %100 = vmatpush1.bf16.msra.mxu0 0
    %101 = vmatprep.subr.bf16.mxu0 0
    %102 = vmatpush1.bf16.msra.mxu0 0
    %103 = vmatprep.subr.bf16.mxu0 0
    %104 = vmatpush1.bf16.msra.mxu0 0
    %105 = vmatprep.subr.bf16.mxu0 0
    %106 = vmatpush1.bf16.msra.mxu0 0
    %107 = vmatprep.subr.bf16.mxu0 0
    %108 = vmatpush1.bf16.msra.mxu0 0
    %109 = vmatprep.subr.bf16.mxu0 0
    %110 = vmatpush1.bf16.msra.mxu0 0
    %111 = vmatprep.subr.bf16.mxu0 0
    %112 = vmatpush1.bf16.msra.mxu0 0
    %113 = vmatprep.subr.bf16.mxu0 0
    %114 = vmatpush1.bf16.msra.mxu0 0
    %115 = vmatprep.subr.bf16.mxu0 0
    %116 = vmatpush1.bf16.msra.mxu0 0
    %117 = vmatprep.subr.bf16.mxu0 0
    %118 = vmatpush1.bf16.msra.mxu0 0
    %119 = vmatprep.subr.bf16.mxu0 0
    %120 = vmatpush1.bf16.msra.mxu0 0
    %121 = vmatprep.subr.bf16.mxu0 0
    %122 = vmatpush1.bf16.msra.mxu0 0
    %123 = vmatprep.mubr.bf16.mxu0 0
    %124 = vmatmul.mubr.bf16.gmra.mrb[0].mxu0 %v80
    %v125 = vpop.f32.mrb[0].mxu0
    %v126 = vadd.f32 0.0, %v125
    %v127 = vpop.f32.mrb[0].mxu0
    %v128 = vpop.f32.mrb[0].mxu0
    %v129 = vadd.f32 0.0, %v128
    %v130 = vpop.f32.mrb[0].mxu0
    %131 = vmatprep.mubr.bf16.mxu0 0
    %132 = vmatmul.mubr.bf16.gmra.mrb[0].mxu0 %v83
    %v133 = vpop.f32.mrb[0].mxu0
    %v134 = vadd.f32 0.0, %v133
    %v135 = vpop.f32.mrb[0].mxu0
    %v136 = vpop.f32.mrb[0].mxu0
    %v137 = vadd.f32 0.0, %v136
    %v138 = vpop.f32.mrb[0].mxu0
    %139 = vmatprep.mubr.bf16.mxu0 0
    %140 = vmatmul.mubr.bf16.gmra.mrb[0].mxu0 %v86
    %v141 = vpop.f32.mrb[0].mxu0
    %v142 = vadd.f32 0.0, %v141
    %v143 = vpop.f32.mrb[0].mxu0
    %v144 = vpop.f32.mrb[0].mxu0
    %v145 = vadd.f32 0.0, %v144
    %v146 = vpop.f32.mrb[0].mxu0
    %147 = vmatprep.mubr.bf16.mxu0 0
    %148 = vmatmul.mubr.bf16.gmra.mrb[0].mxu0 %v89
    %v149 = vpop.f32.mrb[0].mxu0
    %v150 = vadd.f32 0.0, %v149
    %v151 = vpop.f32.mrb[0].mxu0
    %v152 = vpop.f32.mrb[0].mxu0
    %v153 = vadd.f32 0.0, %v152
    %v154 = vpop.f32.mrb[0].mxu0
    %155 = vdwg.mxu0
    %v156 = vmax.f32 %v126, 0.0
    %v157 = vmax.f32 %v129, 0.0
    %v158 = vmax.f32 %v134, 0.0
    %v159 = vmax.f32 %v137, 0.0
    %v160 = vmax.f32 %v142, 0.0
    %v161 = vmax.f32 %v145, 0.0
    %v162 = vmax.f32 %v150, 0.0
    %v163 = vmax.f32 %v153, 0.0
    %v164 = vld [vmem:[%s2] sm:$0xff]
    %v165 = vld [vmem:[%s2 + $0x8] sm:$0xff]
    %v166 = vld [vmem:[%s2 + $0x10] sm:$0xff]
    %v167 = vld [vmem:[%s2 + $0x18] sm:$0xff]
    %v168 = vld [vmem:[%s2 + $0x20] sm:$0xff]
    %v169 = vld [vmem:[%s2 + $0x28] sm:$0xff]
    %v170 = vld [vmem:[%s2 + $0x30] sm:$0xff]
    %v171 = vld [vmem:[%s2 + $0x38] sm:$0xff]
    %173 = vset.pattern.permute.xlu0 0
    %174 = vperm.xlu0 %173, %v164
    %v175 = vpop.permute.xlu0 %174
    %178 = vset.pattern.permute.xlu0 0
    %179 = vperm.xlu0 %178, %v165
    %v180 = vpop.permute.xlu0 %179
    %183 = vset.pattern.permute.xlu0 0
    %184 = vperm.xlu0 %183, %v166
    %v185 = vpop.permute.xlu0 %184
    %188 = vset.pattern.permute.xlu0 0
    %189 = vperm.xlu0 %188, %v167
    %v190 = vpop.permute.xlu0 %189
    %193 = vset.pattern.permute.xlu0 0
    %194 = vperm.xlu0 %193, %v168
    %v195 = vpop.permute.xlu0 %194
    %198 = vset.pattern.permute.xlu0 0
    %199 = vperm.xlu0 %198, %v169
    %v200 = vpop.permute.xlu0 %199
    %203 = vset.pattern.permute.xlu0 0
    %204 = vperm.xlu0 %203, %v170
    %v205 = vpop.permute.xlu0 %204
    %208 = vset.pattern.permute.xlu0 0
    %209 = vperm.xlu0 %208, %v171
    %v210 = vpop.permute.xlu0 %209
    %v212 = vmul.f32 %v156, %v175
    %v213 = vmul.f32 %v157, %v180
    %v214 = vmul.f32 %v158, %v185
    %v215 = vmul.f32 %v159, %v190
    %v216 = vmul.f32 %v160, %v195
    %v217 = vmul.f32 %v161, %v200
    %v218 = vmul.f32 %v162, %v205
    %v219 = vmul.f32 %v163, %v210
    %v220 = vadd.f32 %v212, %v213
    %v221 = vadd.f32 %v220, %v214
    %v222 = vadd.f32 %v221, %v215
    %v223 = vadd.f32 %v222, %v216
    %v224 = vadd.f32 %v223, %v217
    %v225 = vadd.f32 %v224, %v218
    %v226 = vadd.f32 %v225, %v219
    %v227 = vrot.slane %v226, 4
    %v228 = vadd.f32 %v226, %v227
    %v229 = vrot.slane %v228, 2
    %v230 = vadd.f32 %v228, %v229
    %v231 = vrot.slane %v230, 1
    %v232 = vadd.f32 %v230, %v231
    %233 = vst [vmem:[#allocation2] sm:$0x1] %v232
    // Predicated region
    $region14: #{tpu_custom_call.1} parent=1 // pred_check
      _
    $region15: #{tpu_custom_call.1} parent=1 // pred_check_branch
      %235 = sbr.rel (0) target = $region17
    $region16: #{tpu_custom_call.1} parent=1 // pred_region
      %s237 = ssub.s32 16, 16
      %238 = vsyncadd [#allocation3], %s237
      %s240 = sshll.u32 [#allocation2], 4
      %s241 = int_to_ptr.vmem [resolvable:$true] %s240
      %243 = dma.vmem_to_hbm [thread:$0]  %s241, 16, %s3, [#allocation3]
    $region17: #{tpu_custom_call.1} parent=1 // pred_fallthru
      _
    // Predicated region
    $region18: #{tpu_custom_call.1} parent=1 // pred_check
      _
    $region19: #{tpu_custom_call.1} parent=1 // pred_check_branch
      %245 = sbr.rel (0) target = $region21
    $region20: #{tpu_custom_call.1} parent=1 // pred_region
      %246 = dma.done [#allocation3], 16
    $region21: #{tpu_custom_call.1} parent=1 // pred_fallthru
      _
    %247 = vsyncpa [#allocation3], 1

</llo_original>
